<compile_context>
chip_gen: v7x
topology: tpu7x:2x2x1
jax: 0.10.0
libtpu: 0.0.40
codegen_flags: <defaults>
</compile_context>

<pallas_src>
import functools

import jax
import jax.numpy as jnp
import numpy as np
from jax.experimental import pallas as pl
from jax.experimental.pallas import tpu as pltpu

_SENTINEL = 3e37  # large positive; pmax on padded lanes becomes ~-3e37 -> exp == 0


def _round_up(x, m):
    return (x + m - 1) // m * m


def _vmem_capacity_bytes():
    try:
        info = pltpu.get_tpu_info()
        cap = getattr(info, "vmem_capacity_bytes", None)
        if cap:
            return int(cap)
    except Exception:
        pass
    return 64 * 1024 * 1024  # conservative default (v7x per-TC VMEM)


def _neural_sort_loss_kernel(pred_ref, rowsum_ref, pred_t_ref, rowsum_t_ref,
                             out_ref, *, n_valid, inv_tau):
    # pred_ref:     (Bt, N_pad) f32  scores; padded class lanes / batch rows = 0
    # rowsum_ref:   (Bt, N_pad) f32  rowsum/tau; padded class lanes = +sentinel
    # pred_t_ref:   (Bt, R_pad) f32  pred gathered at target class; pads = 0
    # rowsum_t_ref: (Bt, R_pad) f32  rowsum/tau gathered at target class; pads = +sentinel
    # out_ref:      (1, 8, 128) f32  per-tile partial sum (scalar broadcast, lane-dense)
    pred = pred_ref[...]
    rowsum = rowsum_ref[...]
    pred_t = pred_t_ref[...]
    rowsum_t = rowsum_t_ref[...]

    r_pad = pred_t.shape[1]

    # scaling[a] = (N - 1 - 2a) / tau, built from tiny iotas (never at 3-D scale).
    a_col = jax.lax.broadcasted_iota(jnp.int32, (1, r_pad, 1), 1).astype(jnp.float32)
    scal3 = (jnp.float32(n_valid - 1) - 2.0 * a_col) * jnp.float32(inv_tau)   # (1, R_pad, 1)
    a_row = jax.lax.broadcasted_iota(jnp.int32, (1, r_pad), 1).astype(jnp.float32)
    scal_row = (jnp.float32(n_valid - 1) - 2.0 * a_row) * jnp.float32(inv_tau)  # (1, R_pad)

    # P_max[b,a,c]/tau = pred[b,c]*scal[a] - rowsum[b,c]; class-pad mask is baked
    # into the +sentinel padding of rowsum, so no 3-D compare/select is needed.
    pmax = pred[:, None, :] * scal3 - rowsum[:, None, :]          # (Bt, R_pad, N_pad)

    m = jnp.max(pmax, axis=-1, keepdims=True)                     # (Bt, R_pad, 1)
    denom = jnp.sum(jnp.exp(pmax - m), axis=-1)                   # (Bt, R_pad), >= 1

    # Softmax numerator at the target class, entirely in 2-D (gather done in glue).
    # Padded rank rows / padded batch rows have rowsum_t = +sentinel -> num == 0.
    num = jnp.exp(pred_t * scal_row - rowsum_t - m[:, :, 0])      # (Bt, R_pad)

    gathered = num * pl.reciprocal(denom, approx=False)           # exact 1/x (rtol=1e-5 test)
    out_ref[...] = jnp.broadcast_to(jnp.sum(gathered), out_ref.shape)


def _rowsum_abs_diff(pred):
    """Row sums of |p_i - p_j| in O(N log N) via sort + prefix sums (JAX glue)."""
    _, n = pred.shape
    order = jnp.argsort(pred, axis=1)                      # ascending
    p_sorted = jnp.take_along_axis(pred, order, axis=1)
    csum = jnp.cumsum(p_sorted, axis=1)
    total = csum[:, -1:]
    prefix = csum - p_sorted                               # exclusive prefix sum
    k = jnp.arange(n, dtype=jnp.float32)
    rowsum_sorted = (2.0 * k - n) * p_sorted - 2.0 * prefix + total
    inv = jnp.argsort(order, axis=1)                       # inverse permutation
    return jnp.take_along_axis(rowsum_sorted, inv, axis=1)


def neural_sort_loss(pred, gt, *, tau=1.0, block_b=None):
    """Pallas implementation of NeuralSortLoss.forward (hard=False, reduction='mean')."""
    pred = pred.astype(jnp.float32)
    gt = gt.astype(jnp.float32)
    b, n = pred.shape
    inv_tau = 1.0 / float(tau)

    # TODO(synk): torch.argsort(descending=True) has no clean in-kernel Pallas
    # equivalent; the target permutation is computed here (tie-breaking may
    # differ from torch for repeated gt values).
    p_true = jnp.argsort(-gt, axis=1).astype(jnp.int32)            # (B, N)

    rowsum = _rowsum_abs_diff(pred) * jnp.float32(inv_tau)         # (B, N), already / tau
    pred_t = jnp.take_along_axis(pred, p_true, axis=1)             # (B, N)
    rowsum_t = jnp.take_along_axis(rowsum, p_true, axis=1)         # (B, N), already / tau

    # Class (softmax) axis lane-dense; rank axis padded to 8 sublanes.
    n_pad = _round_up(max(n, 128), 128)
    r_pad = _round_up(n, 8)

    # Chip-aware VMEM budgeting (v5e/v6e: 128 MiB, v7x: 64 MiB per TensorCore).
    vmem_cap = _vmem_capacity_bytes()
    vmem_limit = min(vmem_cap // 2, 96 * 1024 * 1024)

    if block_b is None:
        # ~3 live (R_pad, N_pad) f32 3-D temporaries per batch row after slimming
        # (pmax, exp, broadcast headroom); 2-D inputs are negligible next to them.
        per_row = 3 * r_pad * n_pad * 4
        budget = int(vmem_limit * 0.6)
        block_b = max(8, min(budget // per_row // 8 * 8, 256))
        # Keep >=2 grid tiles so dimension_semantics=("parallel",) can use both
        # TensorCores on v7x (no-op on single-TC v5e/v6e, costs ~0.35 us/step).
        half_b = max(8, (_round_up(b, 8) // 2) // 8 * 8)
        block_b = min(block_b, half_b)
    assert block_b % 8 == 0, "block_b must be a multiple of 8"
    block_b = min(block_b, _round_up(b, 8))
    b_pad = _round_up(b, block_b)
    num_tiles = b_pad // block_b

    # Padded operands. Sentinel is applied AFTER the 1/tau scaling (never scaled),
    # so it stays finite for any tau. Padded batch rows: pred=0 & rowsum=0 on valid
    # class lanes -> denom = n, while rowsum_t = sentinel -> numerator = 0.
    pred_p = jnp.zeros((b_pad, n_pad), jnp.float32).at[:b, :n].set(pred)
    rowsum_p = jnp.zeros((b_pad, n_pad), jnp.float32)
    rowsum_p = rowsum_p.at[:, n:].set(jnp.float32(_SENTINEL))
    rowsum_p = rowsum_p.at[:b, :n].set(rowsum)
    pred_t_p = jnp.zeros((b_pad, r_pad), jnp.float32).at[:b, :n].set(pred_t)
    rowsum_t_p = jnp.full((b_pad, r_pad), _SENTINEL, jnp.float32).at[:b, :n].set(rowsum_t)

    kernel = functools.partial(_neural_sort_loss_kernel, n_valid=n, inv_tau=inv_tau)
    partials = pl.pallas_call(
        kernel,
        out_shape=jax.ShapeDtypeStruct((num_tiles, 8, 128), jnp.float32),
        grid=(num_tiles,),
        in_specs=[
            pl.BlockSpec((block_b, n_pad), lambda i: (i, 0)),     # pred
            pl.BlockSpec((block_b, n_pad), lambda i: (i, 0)),     # rowsum / tau (+sentinel pad)
            pl.BlockSpec((block_b, r_pad), lambda i: (i, 0)),     # gathered pred at target
            pl.BlockSpec((block_b, r_pad), lambda i: (i, 0)),     # gathered rowsum at target
        ],
        out_specs=pl.BlockSpec((1, 8, 128), lambda i: (i, 0, 0)),
        compiler_params=pltpu.CompilerParams(
            dimension_semantics=("parallel",),
            vmem_limit_bytes=int(vmem_limit),
        ),
    )(pred_p, rowsum_p, pred_t_p, rowsum_t_p)

    # TODO(synk): hard=True straight-through branch (scatter of argmax) not
    # implemented; module default is hard=False.
    # TODO(synk): for very small N (<64) the padded class lanes waste EUP exp
    # throughput; lane-packing two rows per vreg would recover it if needed.
    total = jnp.sum(partials[:, 0, 0])
    return -total / jnp.float32(b * n)


def _reference(pred, gt, *, tau=1.0):
    """Pure-JAX transcription of the PyTorch forward (hard=False)."""
    pred = pred.astype(jnp.float32)
    b, n = pred.shape
    p = pred[:, :, None]                                          # (B, N, 1)
    a_scores = jnp.abs(p - jnp.transpose(p, (0, 2, 1)))           # (B, N, N)
    b_mat = a_scores @ jnp.ones((n, n), jnp.float32)
    scaling = (n + 1 - 2.0 * (jnp.arange(n, dtype=jnp.float32) + 1.0))
    c_mat = p @ scaling[None, :]
    p_max = jnp.transpose(c_mat - b_mat, (0, 2, 1))
    p_hat = jax.nn.softmax(p_max / tau, axis=-1)
    p_true = jnp.argsort(-gt, axis=1)
    inp = p_hat.reshape(b * n, n)
    tgt = p_true.reshape(b * n)
    return -jnp.mean(inp[jnp.arange(b * n), tgt])


if __name__ == "__main__":
    key = jax.random.PRNGKey(0)
    k1, k2, k3, k4 = jax.random.split(key, 4)

    # Case 1: module's toy shape (batch_size x num_stocks).
    B, N = 2, 8
    pred = jax.random.normal(k1, (B, N), dtype=jnp.float32)
    gt = jax.random.normal(k2, (B, N), dtype=jnp.float32)
    loss = jax.block_until_ready(neural_sort_loss(pred, gt, tau=1.0))
    ref = jax.block_until_ready(_reference(pred, gt, tau=1.0))
    np.testing.assert_allclose(np.asarray(loss), np.asarray(ref), rtol=1e-5, atol=1e-5)

    # Case 2: multi-tile grid (batch padding, rank/class padding, tau != 1).
    B2, N2 = 40, 33
    pred2 = jax.random.normal(k3, (B2, N2), dtype=jnp.float32)
    gt2 = jax.random.normal(k4, (B2, N2), dtype=jnp.float32)
    loss2 = jax.block_until_ready(neural_sort_loss(pred2, gt2, tau=2.0, block_b=16))
    ref2 = jax.block_until_ready(_reference(pred2, gt2, tau=2.0))
    np.testing.assert_allclose(np.asarray(loss2), np.asarray(ref2), rtol=1e-5, atol=1e-5)

    # Case 3: auto block_b path (exercises the chip-aware heuristic / >=2 tiles).
    loss3 = jax.block_until_ready(neural_sort_loss(pred2, gt2, tau=2.0))
    np.testing.assert_allclose(np.asarray(loss3), np.asarray(ref2), rtol=1e-5, atol=1e-5)

    print("KERNEL_OK")
</pallas_src>

<mosaic_0001>
module attributes {stable_mosaic.version = 11 : i64} {
  func.func @_neural_sort_loss_kernel(%arg0: i32, %arg1: memref<8x128xf32, #tpu.memory_space<vmem>>, %arg2: memref<8x128xf32, #tpu.memory_space<vmem>>, %arg3: memref<8x8xf32, #tpu.memory_space<vmem>>, %arg4: memref<8x8xf32, #tpu.memory_space<vmem>>, %arg5: memref<1x8x128xf32, #tpu.memory_space<vmem>>) attributes {dimension_semantics = [#tpu.dimension_semantics<parallel>], iteration_bounds = array<i64: 1>, scalar_prefetch = 0 : i64, scratch_operands = 0 : i64, tpu.core_type = #tpu.core_type<tc>, window_params = [{transform_indices = @transform_0, window_bounds = array<i64: 8, 128>}, {transform_indices = @transform_1, window_bounds = array<i64: 8, 128>}, {transform_indices = @transform_2, window_bounds = array<i64: 8, 8>}, {transform_indices = @transform_3, window_bounds = array<i64: 8, 8>}, {transform_indices = @transform_4, window_bounds = array<i64: 1, 8, 128>}]} {
    %c0 = arith.constant 0 : index
    %c0_0 = arith.constant 0 : index
    %0 = vector.load %arg1[%c0, %c0_0] : memref<8x128xf32, #tpu.memory_space<vmem>>, vector<8x128xf32>
    %c0_1 = arith.constant 0 : index
    %c0_2 = arith.constant 0 : index
    %1 = vector.load %arg2[%c0_1, %c0_2] : memref<8x128xf32, #tpu.memory_space<vmem>>, vector<8x128xf32>
    %c0_3 = arith.constant 0 : index
    %c0_4 = arith.constant 0 : index
    %2 = vector.load %arg3[%c0_3, %c0_4] : memref<8x8xf32, #tpu.memory_space<vmem>>, vector<8x8xf32>
    %c0_5 = arith.constant 0 : index
    %c0_6 = arith.constant 0 : index
    %3 = vector.load %arg4[%c0_5, %c0_6] : memref<8x8xf32, #tpu.memory_space<vmem>>, vector<8x8xf32>
    %4 = tpu.iota {dimensions = array<i32: 1>} : vector<1x8x1xi32>
    %5 = arith.sitofp %4 : vector<1x8x1xi32> to vector<1x8x1xf32>
    %cst = arith.constant 2.000000e+00 : f32
    %6 = vector.broadcast %cst : f32 to vector<1x8x1xf32>
    %7 = arith.mulf %6, %5 : vector<1x8x1xf32>
    %cst_7 = arith.constant 7.000000e+00 : f32
    %8 = vector.broadcast %cst_7 : f32 to vector<1x8x1xf32>
    %9 = arith.subf %8, %7 : vector<1x8x1xf32>
    %cst_8 = arith.constant 1.000000e+00 : f32
    %10 = vector.broadcast %cst_8 : f32 to vector<1x8x1xf32>
    %11 = arith.mulf %9, %10 : vector<1x8x1xf32>
    %12 = tpu.iota {dimensions = array<i32: 1>} : vector<1x8xi32>
    %13 = arith.sitofp %12 : vector<1x8xi32> to vector<1x8xf32>
    %cst_9 = arith.constant 2.000000e+00 : f32
    %14 = vector.broadcast %cst_9 : f32 to vector<1x8xf32>
    %15 = arith.mulf %14, %13 : vector<1x8xf32>
    %cst_10 = arith.constant 7.000000e+00 : f32
    %16 = vector.broadcast %cst_10 : f32 to vector<1x8xf32>
    %17 = arith.subf %16, %15 : vector<1x8xf32>
    %cst_11 = arith.constant 1.000000e+00 : f32
    %18 = vector.broadcast %cst_11 : f32 to vector<1x8xf32>
    %19 = arith.mulf %17, %18 : vector<1x8xf32>
    %20 = vector.shape_cast %0 : vector<8x128xf32> to vector<8x1x128xf32>
    %21 = vector.broadcast %20 : vector<8x1x128xf32> to vector<8x8x128xf32>
    %22 = vector.broadcast %11 : vector<1x8x1xf32> to vector<8x8x128xf32>
    %23 = arith.mulf %21, %22 : vector<8x8x128xf32>
    %24 = vector.shape_cast %1 : vector<8x128xf32> to vector<8x1x128xf32>
    %25 = vector.broadcast %24 : vector<8x1x128xf32> to vector<8x8x128xf32>
    %26 = arith.subf %23, %25 : vector<8x8x128xf32>
    %cst_12 = arith.constant dense<0xFF800000> : vector<8x8xf32>
    %27 = vector.multi_reduction <maximumf>, %26, %cst_12 [2] : vector<8x8x128xf32> to vector<8x8xf32>
    %28 = vector.shape_cast %27 : vector<8x8xf32> to vector<8x8x1xf32>
    %29 = vector.broadcast %28 : vector<8x8x1xf32> to vector<8x8x128xf32>
    %30 = arith.subf %26, %29 : vector<8x8x128xf32>
    %31 = math.exp %30 : vector<8x8x128xf32>
    %cst_13 = arith.constant dense<0.000000e+00> : vector<8x8xf32>
    %32 = vector.multi_reduction <add>, %31, %cst_13 [2] : vector<8x8x128xf32> to vector<8x8xf32>
    %33 = vector.broadcast %19 : vector<1x8xf32> to vector<8x8xf32>
    %34 = arith.mulf %2, %33 : vector<8x8xf32>
    %35 = arith.subf %34, %3 : vector<8x8xf32>
    %36 = vector.shape_cast %28 : vector<8x8x1xf32> to vector<8x8xf32>
    %37 = arith.subf %35, %36 : vector<8x8xf32>
    %38 = math.exp %37 : vector<8x8xf32>
    %39 = tpu.reciprocal %32 : vector<8x8xf32> -> vector<8x8xf32>
    %40 = arith.mulf %38, %39 : vector<8x8xf32>
    %41 = vector.shape_cast %40 : vector<8x8xf32> to vector<1x8x8xf32>
    %cst_14 = arith.constant dense<0.000000e+00> : vector<1xf32>
    %42 = vector.multi_reduction <add>, %41, %cst_14 [1, 2] : vector<1x8x8xf32> to vector<1xf32>
    %43 = vector.shape_cast %42 : vector<1xf32> to vector<1x1x1xf32>
    %44 = vector.extract %43[0, 0, 0] : f32 from vector<1x1x1xf32>
    %45 = vector.broadcast %44 : f32 to vector<1x8x128xf32>
    %c0_15 = arith.constant 0 : index
    %c0_16 = arith.constant 0 : index
    %c0_17 = arith.constant 0 : index
    %46 = vector.load %arg5[%c0_15, %c0_16, %c0_17] : memref<1x8x128xf32, #tpu.memory_space<vmem>>, vector<1x8x128xf32>
    tpu.vector_store %arg5[%c0_15, %c0_16, %c0_17], %45 {strides = array<i32>} : memref<1x8x128xf32, #tpu.memory_space<vmem>>, vector<1x8x128xf32>,
    return
  }
  func.func @transform_0(%arg0: i32) -> (i32, i32) {
    %c0_i32 = arith.constant 0 : i32
    %c0_i32_0 = arith.constant 0 : i32
    return %arg0, %c0_i32 : i32, i32
  }
  func.func @transform_1(%arg0: i32) -> (i32, i32) {
    %c0_i32 = arith.constant 0 : i32
    %c0_i32_0 = arith.constant 0 : i32
    return %arg0, %c0_i32 : i32, i32
  }
  func.func @transform_2(%arg0: i32) -> (i32, i32) {
    %c0_i32 = arith.constant 0 : i32
    %c0_i32_0 = arith.constant 0 : i32
    return %arg0, %c0_i32 : i32, i32
  }
  func.func @transform_3(%arg0: i32) -> (i32, i32) {
    %c0_i32 = arith.constant 0 : i32
    %c0_i32_0 = arith.constant 0 : i32
    return %arg0, %c0_i32 : i32, i32
  }
  func.func @transform_4(%arg0: i32) -> (i32, i32, i32) {
    %c0_i32 = arith.constant 0 : i32
    %c0_i32_0 = arith.constant 0 : i32
    %c0_i32_1 = arith.constant 0 : i32
    return %arg0, %c0_i32, %c0_i32_0 : i32, i32, i32
  }
}

</mosaic_0001>

<llo_original>
// kernel: tpu_custom_call.1
$region0: #{tpu_custom_call.1}
  #allocation0 [shape = 'u32[]', space=smem, size = 0x4, offset = 0x4, fixed_abs, tag = 'smem constant byte address 0x4 - core index']
  #allocation1 [shape = 'u32[144,128]{1,0:T(1,128)}', space=vmem, size = 0x12000, scoped, tag = 'internal scratch']
  %s0 = inlined_call_operand.hbm [shape: f32[8,128], index: 0, kind: input, shape index: {}]
  %s1 = inlined_call_operand.hbm [shape: f32[8,128], index: 1, kind: input, shape index: {}]
  %s2 = inlined_call_operand.hbm [shape: f32[8,8], index: 2, kind: input, shape index: {}]
  %s3 = inlined_call_operand.vmem [shape: f32[8,8], index: 3, kind: input, shape index: {}]
  %s4 = inlined_call_operand.hbm [shape: f32[1,8,128], index: 4, kind: output, shape index: {}]
  %s5 = sld [smem:[#allocation0]]
  $region38: #{tpu_custom_call.1} parent=0
    _
  %s7 = ssub.s32 1, %s5
  %s8 = scalar_select 0, %s7, %s5
  $region1: #{tpu_custom_call.1} parent=0
    #allocation2 [shape = 'u8[4096]{0}', space=vmem, size = 0x1000, scoped, tag = 'input window, operand 0, single buffered']
    #allocation3 [shape = 's32[1]{0}', space=sflag, size = 0x4, scoped, tag = 'scoped memory for tpu_custom_call.1']
    #allocation4 [shape = 's32[1]{0}', space=sflag, size = 0x4, scoped, tag = 'scoped memory for tpu_custom_call.1']
    #allocation5 [shape = 'u8[4096]{0}', space=vmem, size = 0x1000, scoped, tag = 'input window, operand 1, single buffered']
    #allocation6 [shape = 's32[1]{0}', space=sflag, size = 0x4, scoped, tag = 'scoped memory for tpu_custom_call.1']
    #allocation7 [shape = 'u8[4096]{0}', space=vmem, size = 0x1000, scoped, tag = 'input window, operand 2, single buffered']
    #allocation8 [shape = 'u8[4096]{0}', space=vmem, size = 0x1000, scoped, tag = 'output window, operand 0, single buffered']
    %9 = vsyncpa [#allocation3], 0
    %10 = vsyncpa [#allocation6], 0
    %11 = vsyncpa [#allocation4], 0
    // Predicated region
    $region2: #{tpu_custom_call.1} parent=1 // pred_check
      _
    $region3: #{tpu_custom_call.1} parent=1 // pred_check_branch
      %13 = sbr.rel (0) target = $region5
    $region4: #{tpu_custom_call.1} parent=1 // pred_region
      %s15 = ssub.s32 128, 128
      %16 = vsyncadd [#allocation3], %s15
      %s18 = sshll.u32 [#allocation2], 4
      %s19 = int_to_ptr.vmem [resolvable:$true] %s18
      %21 = dma.hbm_to_vmem [thread:$0]  %s0, 128, %s19, [#allocation3]
    $region5: #{tpu_custom_call.1} parent=1 // pred_fallthru
      _
    // Predicated region
    $region6: #{tpu_custom_call.1} parent=1 // pred_check
      _
    $region7: #{tpu_custom_call.1} parent=1 // pred_check_branch
      %23 = sbr.rel (0) target = $region9
    $region8: #{tpu_custom_call.1} parent=1 // pred_region
      %s25 = ssub.s32 128, 128
      %26 = vsyncadd [#allocation6], %s25
      %s28 = sshll.u32 [#allocation5], 4
      %s29 = int_to_ptr.vmem [resolvable:$true] %s28
      %31 = dma.hbm_to_vmem [thread:$0]  %s1, 128, %s29, [#allocation6]
    $region9: #{tpu_custom_call.1} parent=1 // pred_fallthru
      _
    // Predicated region
    $region10: #{tpu_custom_call.1} parent=1 // pred_check
      _
    $region11: #{tpu_custom_call.1} parent=1 // pred_check_branch
      %33 = sbr.rel (0) target = $region13
    $region12: #{tpu_custom_call.1} parent=1 // pred_region
      %s35 = ssub.s32 128, 128
      %36 = vsyncadd [#allocation6], %s35
      %s38 = sshll.u32 [#allocation7], 4
      %s39 = int_to_ptr.vmem [resolvable:$true] %s38
      %41 = dma.hbm_to_vmem [thread:$0]  %s2, 128, %s39, [#allocation6]
    $region13: #{tpu_custom_call.1} parent=1 // pred_fallthru
      _
    // Predicated region
    $region14: #{tpu_custom_call.1} parent=1 // pred_check
      _
    $region15: #{tpu_custom_call.1} parent=1 // pred_check_branch
      %43 = sbr.rel (0) target = $region17
    $region16: #{tpu_custom_call.1} parent=1 // pred_region
      _
    $region17: #{tpu_custom_call.1} parent=1 // pred_fallthru
      _
    // Predicated region
    $region18: #{tpu_custom_call.1} parent=1 // pred_check
      _
    $region19: #{tpu_custom_call.1} parent=1 // pred_check_branch
      %45 = sbr.rel (0) target = $region21
    $region20: #{tpu_custom_call.1} parent=1 // pred_region
      %46 = dma.done [#allocation3], 128
    $region21: #{tpu_custom_call.1} parent=1 // pred_fallthru
      _
    // Predicated region
    $region22: #{tpu_custom_call.1} parent=1 // pred_check
      _
    $region23: #{tpu_custom_call.1} parent=1 // pred_check_branch
      %48 = sbr.rel (0) target = $region25
    $region24: #{tpu_custom_call.1} parent=1 // pred_region
      %49 = dma.done [#allocation6], 128
    $region25: #{tpu_custom_call.1} parent=1 // pred_fallthru
      _
    // Predicated region
    $region26: #{tpu_custom_call.1} parent=1 // pred_check
      _
    $region27: #{tpu_custom_call.1} parent=1 // pred_check_branch
      %51 = sbr.rel (0) target = $region29
    $region28: #{tpu_custom_call.1} parent=1 // pred_region
      %52 = dma.done [#allocation6], 128
    $region29: #{tpu_custom_call.1} parent=1 // pred_fallthru
      _
    %v53 = vld [vmem:[#allocation2] sm:$0xff]
    %v54 = vld [vmem:[#allocation5] sm:$0xff]
    %v55 = vld [vmem:[#allocation7] sm:$0xff]
    %v56 = vld [vmem:[%s3] sm:$0xff]
    %v57 = vlaneseq
    %v58 = vshrl.u32 %v57, 7
    %v59 = vcvt.s32.f32 %v58
    %v60 = vmul.f32 %v59, 2.0
    %v61 = vsub.f32 7.0, %v60
    %v62 = vlaneseq
    %v63 = vand.u32 %v62, 127
    %v64 = vcvt.s32.f32 %v63
    %v65 = vmul.f32 %v64, 2.0
    %v66 = vsub.f32 7.0, %v65
    %v68 = vcombine.high %v53, %v53
    %v70 = vunpack.c.l.s4 1966171168
    %v71 = vunpack.c.0.s8 %v70
    %v72 = vlaneseq
    %v73 = vshrl.u32 %v72, 7
    %v74 = vsub.s32 %v71, %v73
    %v75 = vrot.slane %v53, %v74
    %v77 = vunpack.c.l.s4 1966171168
    %v78 = vunpack.c.0.s8 %v77
    %v79 = vlaneseq
    %v80 = vshrl.u32 %v79, 7
    %v81 = vsub.s32 %v78, %v80
    %v82 = vrot.slane %v68, %v81
    %v83 = vcombine.high %v75, %v75
    %v84 = vcombine.high %v82, %v82
    %v86 = vunpack.c.l.s4 1966171168
    %v87 = vunpack.c.0.s8 %v86
    %v88 = vlaneseq
    %v89 = vshrl.u32 %v88, 7
    %v90 = vsub.s32 %v87, %v89
    %v91 = vrot.slane %v75, %v90
    %v93 = vunpack.c.l.s4 1966171168
    %v94 = vunpack.c.0.s8 %v93
    %v95 = vlaneseq
    %v96 = vshrl.u32 %v95, 7
    %v97 = vsub.s32 %v94, %v96
    %v98 = vrot.slane %v82, %v97
    %v100 = vunpack.c.l.s4 1966171168
    %v101 = vunpack.c.0.s8 %v100
    %v102 = vlaneseq
    %v103 = vshrl.u32 %v102, 7
    %v104 = vsub.s32 %v101, %v103
    %v105 = vrot.slane %v83, %v104
    %v107 = vunpack.c.l.s4 1966171168
    %v108 = vunpack.c.0.s8 %v107
    %v109 = vlaneseq
    %v110 = vshrl.u32 %v109, 7
    %v111 = vsub.s32 %v108, %v110
    %v112 = vrot.slane %v84, %v111
    %v113 = vcombine.high %v91, %v91
    %v114 = vcombine.high %v98, %v98
    %v115 = vcombine.high %v105, %v105
    %v116 = vcombine.high %v112, %v112
    %v117 = vlaneseq
    %v118 = vshrl.u32 %v117, 7
    %v119 = vsub.s32 0, %v118
    %v120 = vrot.slane %v91, %v119
    %v121 = vlaneseq
    %v122 = vshrl.u32 %v121, 7
    %v123 = vsub.s32 0, %v122
    %v124 = vrot.slane %v105, %v123
    %v125 = vlaneseq
    %v126 = vshrl.u32 %v125, 7
    %v127 = vsub.s32 0, %v126
    %v128 = vrot.slane %v113, %v127
    %v129 = vlaneseq
    %v130 = vshrl.u32 %v129, 7
    %v131 = vsub.s32 0, %v130
    %v132 = vrot.slane %v115, %v131
    %v133 = vlaneseq
    %v134 = vshrl.u32 %v133, 7
    %v135 = vsub.s32 0, %v134
    %v136 = vrot.slane %v98, %v135
    %v137 = vlaneseq
    %v138 = vshrl.u32 %v137, 7
    %v139 = vsub.s32 0, %v138
    %v140 = vrot.slane %v112, %v139
    %v141 = vlaneseq
    %v142 = vshrl.u32 %v141, 7
    %v143 = vsub.s32 0, %v142
    %v144 = vrot.slane %v114, %v143
    %v145 = vlaneseq
    %v146 = vshrl.u32 %v145, 7
    %v147 = vsub.s32 0, %v146
    %v148 = vrot.slane %v116, %v147
    %v157 = vmul.f32 %v120, %v61
    %v158 = vmul.f32 %v124, %v61
    %v159 = vmul.f32 %v128, %v61
    %v160 = vmul.f32 %v132, %v61
    %v161 = vmul.f32 %v136, %v61
    %v162 = vmul.f32 %v140, %v61
    %v163 = vmul.f32 %v144, %v61
    %v164 = vmul.f32 %v148, %v61
    %v166 = vcombine.high %v54, %v54
    %v168 = vunpack.c.l.s4 1966171168
    %v169 = vunpack.c.0.s8 %v168
    %v170 = vlaneseq
    %v171 = vshrl.u32 %v170, 7
    %v172 = vsub.s32 %v169, %v171
    %v173 = vrot.slane %v54, %v172
    %v175 = vunpack.c.l.s4 1966171168
    %v176 = vunpack.c.0.s8 %v175
    %v177 = vlaneseq
    %v178 = vshrl.u32 %v177, 7
    %v179 = vsub.s32 %v176, %v178
    %v180 = vrot.slane %v166, %v179
    %v181 = vcombine.high %v173, %v173
    %v182 = vcombine.high %v180, %v180
    %v184 = vunpack.c.l.s4 1966171168
    %v185 = vunpack.c.0.s8 %v184
    %v186 = vlaneseq
    %v187 = vshrl.u32 %v186, 7
    %v188 = vsub.s32 %v185, %v187
    %v189 = vrot.slane %v173, %v188
    %v191 = vunpack.c.l.s4 1966171168
    %v192 = vunpack.c.0.s8 %v191
    %v193 = vlaneseq
    %v194 = vshrl.u32 %v193, 7
    %v195 = vsub.s32 %v192, %v194
    %v196 = vrot.slane %v180, %v195
    %v198 = vunpack.c.l.s4 1966171168
    %v199 = vunpack.c.0.s8 %v198
    %v200 = vlaneseq
    %v201 = vshrl.u32 %v200, 7
    %v202 = vsub.s32 %v199, %v201
    %v203 = vrot.slane %v181, %v202
    %v205 = vunpack.c.l.s4 1966171168
    %v206 = vunpack.c.0.s8 %v205
    %v207 = vlaneseq
    %v208 = vshrl.u32 %v207, 7
    %v209 = vsub.s32 %v206, %v208
    %v210 = vrot.slane %v182, %v209
    %v211 = vcombine.high %v189, %v189
    %v212 = vcombine.high %v196, %v196
    %v213 = vcombine.high %v203, %v203
    %v214 = vcombine.high %v210, %v210
    %v215 = vlaneseq
    %v216 = vshrl.u32 %v215, 7
    %v217 = vsub.s32 0, %v216
    %v218 = vrot.slane %v189, %v217
    %v219 = vlaneseq
    %v220 = vshrl.u32 %v219, 7
    %v221 = vsub.s32 0, %v220
    %v222 = vrot.slane %v203, %v221
    %v223 = vlaneseq
    %v224 = vshrl.u32 %v223, 7
    %v225 = vsub.s32 0, %v224
    %v226 = vrot.slane %v211, %v225
    %v227 = vlaneseq
    %v228 = vshrl.u32 %v227, 7
    %v229 = vsub.s32 0, %v228
    %v230 = vrot.slane %v213, %v229
    %v231 = vlaneseq
    %v232 = vshrl.u32 %v231, 7
    %v233 = vsub.s32 0, %v232
    %v234 = vrot.slane %v196, %v233
    %v235 = vlaneseq
    %v236 = vshrl.u32 %v235, 7
    %v237 = vsub.s32 0, %v236
    %v238 = vrot.slane %v210, %v237
    %v239 = vlaneseq
    %v240 = vshrl.u32 %v239, 7
    %v241 = vsub.s32 0, %v240
    %v242 = vrot.slane %v212, %v241
    %v243 = vlaneseq
    %v244 = vshrl.u32 %v243, 7
    %v245 = vsub.s32 0, %v244
    %v246 = vrot.slane %v214, %v245
    %v255 = vsub.f32 %v157, %v218
    %v256 = vsub.f32 %v158, %v222
    %v257 = vsub.f32 %v159, %v226
    %v258 = vsub.f32 %v160, %v230
    %v259 = vsub.f32 %v161, %v234
    %v260 = vsub.f32 %v162, %v238
    %v261 = vsub.f32 %v163, %v242
    %v262 = vsub.f32 %v164, %v246
    %263 = vmax.xlane.f32.xlu0 %v255
    %v264 = vpop.xlane.xlu0 %263
    %265 = vmax.xlane.f32.xlu0 %v256
    %v266 = vpop.xlane.xlu0 %265
    %267 = vmax.xlane.f32.xlu0 %v257
    %v268 = vpop.xlane.xlu0 %267
    %269 = vmax.xlane.f32.xlu0 %v258
    %v270 = vpop.xlane.xlu0 %269
    %271 = vmax.xlane.f32.xlu0 %v259
    %v272 = vpop.xlane.xlu0 %271
    %273 = vmax.xlane.f32.xlu0 %v260
    %v274 = vpop.xlane.xlu0 %273
    %275 = vmax.xlane.f32.xlu0 %v261
    %v276 = vpop.xlane.xlu0 %275
    %277 = vmax.xlane.f32.xlu0 %v262
    %v278 = vpop.xlane.xlu0 %277
    %v279 = vsub.f32 %v255, %v264
    %v280 = vsub.f32 %v256, %v266
    %v281 = vsub.f32 %v257, %v268
    %v282 = vsub.f32 %v258, %v270
    %v283 = vsub.f32 %v259, %v272
    %v284 = vsub.f32 %v260, %v274
    %v285 = vsub.f32 %v261, %v276
    %v286 = vsub.f32 %v262, %v278
    %v287 = vmul.f32 %v279, 1.442695
    %v288 = vpow.pop %v287
    %v289 = vmul.f32 %v280, 1.442695
    %v290 = vpow.pop %v289
    %v291 = vmul.f32 %v281, 1.442695
    %v292 = vpow.pop %v291
    %v293 = vmul.f32 %v282, 1.442695
    %v294 = vpow.pop %v293
    %v295 = vmul.f32 %v283, 1.442695
    %v296 = vpow.pop %v295
    %v297 = vmul.f32 %v284, 1.442695
    %v298 = vpow.pop %v297
    %v299 = vmul.f32 %v285, 1.442695
    %v300 = vpow.pop %v299
    %v301 = vmul.f32 %v286, 1.442695
    %v302 = vpow.pop %v301
    %303 = vadd.xlane.f32.xlu0 %v288
    %v304 = vpop.xlane.xlu0 %303
    %305 = vadd.xlane.f32.xlu0 %v290
    %v306 = vpop.xlane.xlu0 %305
    %307 = vadd.xlane.f32.xlu0 %v292
    %v308 = vpop.xlane.xlu0 %307
    %309 = vadd.xlane.f32.xlu0 %v294
    %v310 = vpop.xlane.xlu0 %309
    %311 = vadd.xlane.f32.xlu0 %v296
    %v312 = vpop.xlane.xlu0 %311
    %313 = vadd.xlane.f32.xlu0 %v298
    %v314 = vpop.xlane.xlu0 %313
    %315 = vadd.xlane.f32.xlu0 %v300
    %v316 = vpop.xlane.xlu0 %315
    %317 = vadd.xlane.f32.xlu0 %v302
    %v318 = vpop.xlane.xlu0 %317
    %v319 = vmul.f32 %v55, %v66
    %v320 = vsub.f32 %v319, %v56
    %v329 = vlaneseq
    %v330 = vshrl.u32 %v329, 7
    %v331 = vsub.s32 %v63, %v330
    %v332 = vrot.slane %v264, %v331
    %v333 = vlaneseq
    %v334 = vshrl.u32 %v333, 7
    %v335 = vsub.s32 %v63, %v334
    %v336 = vrot.slane %v266, %v335
    %v337 = vlaneseq
    %v338 = vshrl.u32 %v337, 7
    %v339 = vsub.s32 %v63, %v338
    %v340 = vrot.slane %v268, %v339
    %v341 = vlaneseq
    %v342 = vshrl.u32 %v341, 7
    %v343 = vsub.s32 %v63, %v342
    %v344 = vrot.slane %v270, %v343
    %v345 = vlaneseq
    %v346 = vshrl.u32 %v345, 7
    %v347 = vsub.s32 %v63, %v346
    %v348 = vrot.slane %v272, %v347
    %v349 = vlaneseq
    %v350 = vshrl.u32 %v349, 7
    %v351 = vsub.s32 %v63, %v350
    %v352 = vrot.slane %v274, %v351
    %v353 = vlaneseq
    %v354 = vshrl.u32 %v353, 7
    %v355 = vsub.s32 %v63, %v354
    %v356 = vrot.slane %v276, %v355
    %v357 = vlaneseq
    %v358 = vshrl.u32 %v357, 7
    %v359 = vsub.s32 %v63, %v358
    %v360 = vrot.slane %v278, %v359
    %vm361 = vcmask 1041409
    %v362 = vsel %vm361, %v336, %v332
    %vm363 = vcmask 1042434
    %v364 = vsel %vm363, %v340, %v362
    %vm365 = vcmask 1043459
    %v366 = vsel %vm365, %v344, %v364
    %vm367 = vcmask 1044484
    %v368 = vsel %vm367, %v348, %v366
    %vm369 = vcmask 1045509
    %v370 = vsel %vm369, %v352, %v368
    %vm371 = vcmask 1046534
    %v372 = vsel %vm371, %v356, %v370
    %vm373 = vcmask 1047559
    %v374 = vsel %vm373, %v360, %v372
    %v376 = vsub.f32 %v320, %v374
    %v377 = vmul.f32 %v376, 1.442695
    %v378 = vpow.pop %v377
    %v379 = vrcp.pop %v304
    %v380 = vrcp.pop %v306
    %v381 = vrcp.pop %v308
    %v382 = vrcp.pop %v310
    %v383 = vrcp.pop %v312
    %v384 = vrcp.pop %v314
    %v385 = vrcp.pop %v316
    %v386 = vrcp.pop %v318
    %v395 = vlaneseq
    %v396 = vshrl.u32 %v395, 7
    %v397 = vsub.s32 %v63, %v396
    %v398 = vrot.slane %v379, %v397
    %v399 = vlaneseq
    %v400 = vshrl.u32 %v399, 7
    %v401 = vsub.s32 %v63, %v400
    %v402 = vrot.slane %v380, %v401
    %v403 = vlaneseq
    %v404 = vshrl.u32 %v403, 7
    %v405 = vsub.s32 %v63, %v404
    %v406 = vrot.slane %v381, %v405
    %v407 = vlaneseq
    %v408 = vshrl.u32 %v407, 7
    %v409 = vsub.s32 %v63, %v408
    %v410 = vrot.slane %v382, %v409
    %v411 = vlaneseq
    %v412 = vshrl.u32 %v411, 7
    %v413 = vsub.s32 %v63, %v412
    %v414 = vrot.slane %v383, %v413
    %v415 = vlaneseq
    %v416 = vshrl.u32 %v415, 7
    %v417 = vsub.s32 %v63, %v416
    %v418 = vrot.slane %v384, %v417
    %v419 = vlaneseq
    %v420 = vshrl.u32 %v419, 7
    %v421 = vsub.s32 %v63, %v420
    %v422 = vrot.slane %v385, %v421
    %v423 = vlaneseq
    %v424 = vshrl.u32 %v423, 7
    %v425 = vsub.s32 %v63, %v424
    %v426 = vrot.slane %v386, %v425
    %v427 = vsel %vm361, %v402, %v398
    %v428 = vsel %vm363, %v406, %v427
    %v429 = vsel %vm365, %v410, %v428
    %v430 = vsel %vm367, %v414, %v429
    %v431 = vsel %vm369, %v418, %v430
    %v432 = vsel %vm371, %v422, %v431
    %v433 = vsel %vm373, %v426, %v432
    %v435 = vmul.f32 %v378, %v433
    %vm436 = vcmask 64512
    %v437 = vsel %vm436, %v435, 0.0
    %438 = vadd.xlane.f32.xlu0 %v437
    %v439 = vpop.xlane.xlu0 %438
    %v440 = vrot.slane %v439, 4
    %v441 = vadd.f32 %v439, %v440
    %v442 = vrot.slane %v441, 2
    %v443 = vadd.f32 %v441, %v442
    %v444 = vrot.slane %v443, 1
    %v445 = vadd.f32 %v443, %v444
    %s446 = vtos %v445
    %v447 = vstv %s446
    %448 = vst [vmem:[#allocation8] sm:$0xff] %v447
    // Predicated region
    $region30: #{tpu_custom_call.1} parent=1 // pred_check
      _
    $region31: #{tpu_custom_call.1} parent=1 // pred_check_branch
      %450 = sbr.rel (0) target = $region33
    $region32: #{tpu_custom_call.1} parent=1 // pred_region
      %s452 = ssub.s32 128, 128
      %453 = vsyncadd [#allocation4], %s452
      %s455 = sshll.u32 [#allocation8], 4
      %s456 = int_to_ptr.vmem [resolvable:$true] %s455
      %458 = dma.vmem_to_hbm [thread:$0]  %s456, 128, %s4, [#allocation4]
    $region33: #{tpu_custom_call.1} parent=1 // pred_fallthru
      _
    // Predicated region
    $region34: #{tpu_custom_call.1} parent=1 // pred_check
      _
    $region35: #{tpu_custom_call.1} parent=1 // pred_check_branch
      %460 = sbr.rel (0) target = $region37
    $region36: #{tpu_custom_call.1} parent=1 // pred_region
      %461 = dma.done [#allocation4], 128
    $region37: #{tpu_custom_call.1} parent=1 // pred_fallthru
      _
    %462 = vsyncpa [#allocation3], 1
    %463 = vsyncpa [#allocation6], 1
    %464 = vsyncpa [#allocation4], 1

</llo_original>
